<compile_context>
chip_gen: v5e
topology: v5e:2x2
jax: 0.10.0
libtpu: 0.0.40
codegen_flags: <defaults>
</compile_context>

<pallas_src>
import functools

import jax
import jax.numpy as jnp
from jax import lax
from jax.experimental import pallas as pl
from jax.experimental.pallas import tpu as pltpu


def _round_up(x, m):
    return ((x + m - 1) // m) * m


def _bkd2_kernel(s_ref, t_ref, logw_ref, part_ref, *,
                 inv_t, tile_n, rows_in_last, num_tiles):
    i = pl.program_id(0)

    # Cast to f32 in-kernel; '/ T' folded into a precomputed '* (1/T)'.
    s = s_ref[...].astype(jnp.float32) * inv_t          # (TN, C) student logits / T
    t = t_ref[...].astype(jnp.float32) * inv_t          # (TN, C) teacher logits / T
    log_w = logw_ref[...]                               # (1, C); -1e30 where w == 0

    # ---- teacher: softmax * w renormalized; softmax denominator cancels and
    #      the *w multiply is absorbed into the exponent.
    t_max = jnp.max(t, axis=1, keepdims=True)
    u = (t - t_max) + log_w                             # log of unnormalized pred_t
    pw = jnp.exp(u)                                     # 0 exactly where w == 0
    sum_pw = jnp.sum(pw, axis=1, keepdims=True)         # (TN, 1)
    pred_t = pw * pl.reciprocal(sum_pw, approx=False)   # (TN, C)

    # ---- student: only a per-row log-sum-exp is needed.
    s_max = jnp.max(s, axis=1, keepdims=True)
    s_shift = s - s_max
    log_sum_s = jnp.log(jnp.sum(jnp.exp(s_shift), axis=1, keepdims=True))  # (TN,1)
    col = log_sum_s - jnp.log(sum_pw)                   # (TN, 1) per-row scalar

    # kl = pred_t * (log(pred_t) - log_p_s), both logs expanded analytically.
    # Where w == 0: pred_t == 0 and (u - s_shift + col) is large-negative but
    # finite (-1e30 sentinel), so kl == 0 exactly (never 0 * inf).
    kl = pred_t * ((u - s_shift) + col)                 # (TN, C)

    def _write(x):
        part_ref[...] = jnp.sum(x, axis=0, keepdims=True)[None, :, :]

    if rows_in_last == tile_n:
        # Batch divides evenly: no padded rows anywhere, no masking needed.
        _write(kl)
    else:
        # Only the last tile can contain padded (stale-VMEM) rows; gate the
        # masking select behind pl.when and build it from a (TN, 1) column.
        @pl.when(i != num_tiles - 1)
        def _():
            _write(kl)

        @pl.when(i == num_tiles - 1)
        def _():
            rows = lax.broadcasted_iota(jnp.int32, (tile_n, 1), 0)
            _write(jnp.where(rows < rows_in_last, kl, 0.0))


def bkd2_loss(out_s, out_t, weight_lamda, T, *, tile_n=None):
    """Pallas implementation of BKD2Loss(T)(out_s, out_t, weight_lamda).

    weight_lamda is assumed non-negative (as in the PyTorch usage).
    """
    N, C = out_s.shape
    itemsize = jnp.dtype(out_s.dtype).itemsize

    # Precompute log(w) once; -1e30 sentinel where w == 0 (finite, so the
    # in-kernel 0 * sentinel products stay exactly 0, never NaN).
    w = weight_lamda.astype(jnp.float32).reshape(1, C)
    logw = jnp.where(w > 0, jnp.log(jnp.where(w > 0, w, 1.0)), -1e30)
    logw = logw.astype(jnp.float32)

    # ---- batch tile size (dtype-aware). Budget ~24 MiB of live VMEM per step:
    # 2 inputs x 2 pipeline buffers x itemsize + ~10 full-tile f32 temporaries.
    if tile_n is None:
        bytes_per_row = C * (4 * itemsize + 40)
        tile_n = (24 * 1024 * 1024) // max(bytes_per_row, 1)
    tile_n = max(8, (int(tile_n) // 8) * 8)
    if N >= 16:
        # Keep >= 2 batch tiles so the "parallel" grid axis spans both v7x TCs.
        tile_n = min(tile_n, _round_up((N + 1) // 2, 8))

    # Very small batches: pad rows up to one aligned tile (cheap; N < 8 only).
    if N < 8:
        pad = ((0, 8 - N), (0, 0))
        out_s = jnp.pad(out_s, pad)
        out_t = jnp.pad(out_t, pad)
        n_rows = 8
    else:
        n_rows = N
    # Second-minor block dim stays a multiple of 8 and never exceeds the array;
    # the ragged last block (if any) is handled by Pallas + the in-kernel mask.
    tile_n = max(8, min(tile_n, (n_rows // 8) * 8))

    num_tiles = pl.cdiv(n_rows, tile_n)
    rows_in_last = N - (num_tiles - 1) * tile_n   # valid rows in the last tile

    # Scoped-VMEM limit sized to the actual footprint (v5e default is 16 MiB;
    # keep well under v7x's 64 MiB physical).
    footprint = (4 * tile_n * C * itemsize      # double-buffered input blocks
                 + 12 * tile_n * C * 4          # f32 full-tile temporaries
                 + 8 * C * 4)                   # log-weight row + output block
    vmem_limit = int(min(max(footprint + (2 << 20), 32 << 20), 48 << 20))

    kernel = functools.partial(
        _bkd2_kernel, inv_t=1.0 / float(T), tile_n=tile_n,
        rows_in_last=rows_in_last, num_tiles=num_tiles)

    cost = pl.CostEstimate(
        flops=10 * N * C,
        transcendentals=2 * N * C + 4 * N,
        bytes_accessed=2 * N * C * itemsize + (num_tiles + 1) * C * 4,
    )

    partials = pl.pallas_call(
        kernel,
        out_shape=jax.ShapeDtypeStruct((num_tiles, 1, C), jnp.float32),
        grid=(num_tiles,),
        in_specs=[
            pl.BlockSpec((tile_n, C), lambda i: (i, 0)),
            pl.BlockSpec((tile_n, C), lambda i: (i, 0)),
            pl.BlockSpec((1, C), lambda i: (0, 0)),   # log-weights stay resident
        ],
        out_specs=pl.BlockSpec((1, 1, C), lambda i: (i, 0, 0)),
        compiler_params=pltpu.CompilerParams(
            dimension_semantics=("parallel",),
            vmem_limit_bytes=vmem_limit),
        cost_estimate=cost,
    )(out_s, out_t, logw)

    # Fold mean(dim=0) and * T * T into a single scalar applied once.
    return jnp.sum(partials) * ((float(T) * float(T)) / float(N))


def _bkd2_loss_ref(out_s, out_t, weight_lamda, T):
    """Pure-JAX reference mirroring the PyTorch forward."""
    pred_t = jax.nn.softmax(out_t / T, axis=1)
    pred_t = pred_t * weight_lamda[None, :]
    pred_t = pred_t / jnp.sum(pred_t, axis=1, keepdims=True)
    log_p_s = jax.nn.log_softmax(out_s / T, axis=1)
    kl = jnp.where(pred_t > 0, pred_t * jnp.log(pred_t), 0.0) - pred_t * log_p_s
    kd = jnp.mean(kl, axis=0)
    return jnp.sum(kd) * T * T


if __name__ == "__main__":
    # 30 logit rows (not a multiple of any tile) over 128 classes: exercises
    # ragged-last-block masking, multi-tile batch tiling, and zero weights.
    N, C = 30, 128
    T = 4.0

    key = jax.random.PRNGKey(0)
    k_s, k_t, k_w = jax.random.split(key, 3)
    out_s = jax.random.normal(k_s, (N, C), dtype=jnp.float32)
    out_t = jax.random.normal(k_t, (N, C), dtype=jnp.float32)
    weight_lamda = jax.random.uniform(k_w, (C,), dtype=jnp.float32,
                                      minval=0.5, maxval=2.0)
    # Exercise the w == 0 masking path.
    weight_lamda = weight_lamda.at[3].set(0.0).at[77].set(0.0)

    ref = _bkd2_loss_ref(out_s, out_t, weight_lamda, T)

    # Forced small tiles: 4 batch tiles of 8 rows, ragged last tile (6 rows).
    loss_tiled = bkd2_loss(out_s, out_t, weight_lamda, T, tile_n=8)
    # Auto tile size: clamped to 2 tiles (16 + 14 rows) for megacore coverage.
    loss_auto = bkd2_loss(out_s, out_t, weight_lamda, T)

    # bf16 logits path (kernel upcasts internally; tiles sized off itemsize).
    s_bf = out_s.astype(jnp.bfloat16)
    t_bf = out_t.astype(jnp.bfloat16)
    ref_bf = _bkd2_loss_ref(s_bf.astype(jnp.float32), t_bf.astype(jnp.float32),
                            weight_lamda, T)
    loss_bf = bkd2_loss(s_bf, t_bf, weight_lamda, T)

    jax.block_until_ready((loss_tiled, loss_auto, loss_bf))

    assert jnp.allclose(loss_tiled, ref, rtol=1e-4, atol=1e-5), (loss_tiled, ref)
    assert jnp.allclose(loss_auto, ref, rtol=1e-4, atol=1e-5), (loss_auto, ref)
    assert jnp.allclose(loss_bf, ref_bf, rtol=1e-3, atol=1e-4), (loss_bf, ref_bf)

    print("KERNEL_OK")
</pallas_src>

<mosaic_0001>
module attributes {stable_mosaic.version = 11 : i64} {
  func.func @_bkd2_kernel(%arg0: i32, %arg1: memref<8x128xf32, #tpu.memory_space<vmem>>, %arg2: memref<8x128xf32, #tpu.memory_space<vmem>>, %arg3: memref<1x128xf32, #tpu.memory_space<vmem>>, %arg4: memref<1x1x128xf32, #tpu.memory_space<vmem>>) attributes {dimension_semantics = [#tpu.dimension_semantics<parallel>], iteration_bounds = array<i64: 4>, scalar_prefetch = 0 : i64, scratch_operands = 0 : i64, tpu.core_type = #tpu.core_type<tc>, window_params = [{transform_indices = @transform_0, window_bounds = array<i64: 8, 128>}, {transform_indices = @transform_1, window_bounds = array<i64: 8, 128>}, {pipeline_mode = #tpu.pipeline_mode<synchronous>, transform_indices = @transform_2, window_bounds = array<i64: 1, 128>}, {transform_indices = @transform_3, window_bounds = array<i64: 1, 1, 128>}]} {
    %c0 = arith.constant 0 : index
    %c0_0 = arith.constant 0 : index
    %0 = vector.load %arg1[%c0, %c0_0] : memref<8x128xf32, #tpu.memory_space<vmem>>, vector<8x128xf32>
    %cst = arith.constant 2.500000e-01 : f32
    %1 = vector.broadcast %cst : f32 to vector<8x128xf32>
    %2 = arith.mulf %0, %1 : vector<8x128xf32>
    %c0_1 = arith.constant 0 : index
    %c0_2 = arith.constant 0 : index
    %3 = vector.load %arg2[%c0_1, %c0_2] : memref<8x128xf32, #tpu.memory_space<vmem>>, vector<8x128xf32>
    %cst_3 = arith.constant 2.500000e-01 : f32
    %4 = vector.broadcast %cst_3 : f32 to vector<8x128xf32>
    %5 = arith.mulf %3, %4 : vector<8x128xf32>
    %c0_4 = arith.constant 0 : index
    %c0_5 = arith.constant 0 : index
    %6 = vector.load %arg3[%c0_4, %c0_5] : memref<1x128xf32, #tpu.memory_space<vmem>>, vector<1x128xf32>
    %cst_6 = arith.constant dense<0xFF800000> : vector<8xf32>
    %7 = vector.multi_reduction <maximumf>, %5, %cst_6 [1] : vector<8x128xf32> to vector<8xf32>
    %8 = vector.shape_cast %7 : vector<8xf32> to vector<8x1xf32>
    %9 = vector.broadcast %8 : vector<8x1xf32> to vector<8x128xf32>
    %10 = arith.subf %5, %9 : vector<8x128xf32>
    %11 = vector.broadcast %6 : vector<1x128xf32> to vector<8x128xf32>
    %12 = arith.addf %10, %11 : vector<8x128xf32>
    %13 = math.exp %12 : vector<8x128xf32>
    %cst_7 = arith.constant dense<0.000000e+00> : vector<8xf32>
    %14 = vector.multi_reduction <add>, %13, %cst_7 [1] : vector<8x128xf32> to vector<8xf32>
    %15 = vector.shape_cast %14 : vector<8xf32> to vector<8x1xf32>
    %16 = tpu.reciprocal %15 : vector<8x1xf32> -> vector<8x1xf32>
    %17 = vector.broadcast %16 : vector<8x1xf32> to vector<8x128xf32>
    %18 = arith.mulf %13, %17 : vector<8x128xf32>
    %cst_8 = arith.constant dense<0xFF800000> : vector<8xf32>
    %19 = vector.multi_reduction <maximumf>, %2, %cst_8 [1] : vector<8x128xf32> to vector<8xf32>
    %20 = vector.shape_cast %19 : vector<8xf32> to vector<8x1xf32>
    %21 = vector.broadcast %20 : vector<8x1xf32> to vector<8x128xf32>
    %22 = arith.subf %2, %21 : vector<8x128xf32>
    %23 = math.exp %22 : vector<8x128xf32>
    %cst_9 = arith.constant dense<0.000000e+00> : vector<8xf32>
    %24 = vector.multi_reduction <add>, %23, %cst_9 [1] : vector<8x128xf32> to vector<8xf32>
    %25 = vector.shape_cast %24 : vector<8xf32> to vector<8x1xf32>
    %26 = math.log %25 : vector<8x1xf32>
    %27 = math.log %15 : vector<8x1xf32>
    %28 = arith.subf %26, %27 : vector<8x1xf32>
    %29 = arith.subf %12, %22 : vector<8x128xf32>
    %30 = vector.broadcast %28 : vector<8x1xf32> to vector<8x128xf32>
    %31 = arith.addf %29, %30 : vector<8x128xf32>
    %32 = arith.mulf %18, %31 : vector<8x128xf32>
    %c3_i32 = arith.constant 3 : i32
    %33 = arith.cmpi ne, %arg0, %c3_i32 : i32
    %34 = arith.extui %33 : i1 to i32
    %c0_i32 = arith.constant 0 : i32
    %35 = arith.cmpi ne, %34, %c0_i32 : i32
    scf.if %35 {
      %cst_12 = arith.constant dense<0.000000e+00> : vector<128xf32>
      %39 = vector.multi_reduction <add>, %32, %cst_12 [0] : vector<8x128xf32> to vector<128xf32>
      %40 = vector.shape_cast %39 : vector<128xf32> to vector<1x128xf32>
      %41 = vector.shape_cast %40 : vector<1x128xf32> to vector<1x1x128xf32>
      %c0_13 = arith.constant 0 : index
      %c0_14 = arith.constant 0 : index
      %c0_15 = arith.constant 0 : index
      %42 = vector.load %arg4[%c0_13, %c0_14, %c0_15] : memref<1x1x128xf32, #tpu.memory_space<vmem>>, vector<1x1x128xf32>
      tpu.vector_store %arg4[%c0_13, %c0_14, %c0_15], %41 {strides = array<i32>} : memref<1x1x128xf32, #tpu.memory_space<vmem>>, vector<1x1x128xf32>,
    } else {
    }
    %c3_i32_10 = arith.constant 3 : i32
    %36 = arith.cmpi eq, %arg0, %c3_i32_10 : i32
    %37 = arith.extui %36 : i1 to i32
    %c0_i32_11 = arith.constant 0 : i32
    %38 = arith.cmpi ne, %37, %c0_i32_11 : i32
    scf.if %38 {
      %39 = tpu.iota {dimensions = array<i32: 0>} : vector<8x1xi32>
      %c6_i32 = arith.constant 6 : i32
      %40 = vector.broadcast %c6_i32 : i32 to vector<8x1xi32>
      %41 = arith.cmpi slt, %39, %40 : vector<8x1xi32>
      %cst_12 = arith.constant 0.000000e+00 : f32
      %42 = vector.shape_cast %41 : vector<8x1xi1> to vector<8x1xi1>
      %43 = vector.broadcast %42 : vector<8x1xi1> to vector<8x128xi1>
      %44 = vector.broadcast %cst_12 : f32 to vector<8x128xf32>
      %45 = arith.select %43, %32, %44 : vector<8x128xi1>, vector<8x128xf32>
      %cst_13 = arith.constant dense<0.000000e+00> : vector<128xf32>
      %46 = vector.multi_reduction <add>, %45, %cst_13 [0] : vector<8x128xf32> to vector<128xf32>
      %47 = vector.shape_cast %46 : vector<128xf32> to vector<1x128xf32>
      %48 = vector.shape_cast %47 : vector<1x128xf32> to vector<1x1x128xf32>
      %c0_14 = arith.constant 0 : index
      %c0_15 = arith.constant 0 : index
      %c0_16 = arith.constant 0 : index
      %49 = vector.load %arg4[%c0_14, %c0_15, %c0_16] : memref<1x1x128xf32, #tpu.memory_space<vmem>>, vector<1x1x128xf32>
      tpu.vector_store %arg4[%c0_14, %c0_15, %c0_16], %48 {strides = array<i32>} : memref<1x1x128xf32, #tpu.memory_space<vmem>>, vector<1x1x128xf32>,
    } else {
    }
    return
  }
  func.func @transform_0(%arg0: i32) -> (i32, i32) {
    %c0_i32 = arith.constant 0 : i32
    %c0_i32_0 = arith.constant 0 : i32
    return %arg0, %c0_i32 : i32, i32
  }
  func.func @transform_1(%arg0: i32) -> (i32, i32) {
    %c0_i32 = arith.constant 0 : i32
    %c0_i32_0 = arith.constant 0 : i32
    return %arg0, %c0_i32 : i32, i32
  }
  func.func @transform_2(%arg0: i32) -> (i32, i32) {
    %c0_i32 = arith.constant 0 : i32
    %c0_i32_0 = arith.constant 0 : i32
    %c0_i32_1 = arith.constant 0 : i32
    return %c0_i32, %c0_i32_0 : i32, i32
  }
  func.func @transform_3(%arg0: i32) -> (i32, i32, i32) {
    %c0_i32 = arith.constant 0 : i32
    %c0_i32_0 = arith.constant 0 : i32
    %c0_i32_1 = arith.constant 0 : i32
    return %arg0, %c0_i32, %c0_i32_0 : i32, i32, i32
  }
}

</mosaic_0001>

<llo_original>
// kernel: tpu_custom_call.1
$region0: #{tpu_custom_call.1}
  #allocation0 [shape = 'u32[]', space=smem, size = 0x4, offset = 0x4, fixed_abs, tag = 'smem constant byte address 0x4 - core index']
  #allocation1 [shape = 'u32[72,128]{1,0:T(1,128)}', space=vmem, size = 0x9000, scoped, tag = 'internal scratch']
  %s0 = inlined_call_operand.hbm [shape: f32[30,128], index: 0, kind: input, shape index: {}]
  %s1 = inlined_call_operand.hbm [shape: f32[30,128], index: 1, kind: input, shape index: {}]
  %s2 = inlined_call_operand.vmem [shape: f32[1,128], index: 2, kind: input, shape index: {}]
  %s3 = inlined_call_operand.hbm [shape: f32[4,1,128], index: 3, kind: output, shape index: {}]
  %s4 = sld [smem:[#allocation0]]
  $region61: #{tpu_custom_call.1} parent=0
    _
  %s6 = ssub.s32 1, %s4
  %s7 = scalar_select 0, %s6, %s4
  $region1: #{tpu_custom_call.1} parent=0
    #allocation2 [shape = 'u8[8192]{0}', space=vmem, size = 0x2000, scoped, tag = 'input window, operand 0']
    #allocation3 [shape = 's32[2]{0}', space=sflag, size = 0x8, scoped, tag = 'scoped memory for tpu_custom_call.1']
    #allocation4 [shape = 's32[2]{0}', space=sflag, size = 0x8, scoped, tag = 'scoped memory for tpu_custom_call.1']
    #allocation5 [shape = 'u8[8192]{0}', space=vmem, size = 0x2000, scoped, tag = 'input window, operand 1']
    #allocation6 [shape = 's32[2]{0}', space=sflag, size = 0x8, scoped, tag = 'scoped memory for tpu_custom_call.1']
    #allocation7 [shape = 'u8[1024]{0}', space=vmem, size = 0x400, scoped, tag = 'output window, operand 0']
    %8 = vsyncpa [#allocation3], 0
    %s9 = scalar_lea.sflag [#allocation3], 1
    %10 = vsyncpa %s9, 0
    %11 = vsyncpa [#allocation6], 0
    %s12 = scalar_lea.sflag [#allocation6], 1
    %13 = vsyncpa %s12, 0
    %14 = vsyncpa [#allocation4], 0
    %s15 = scalar_lea.sflag [#allocation4], 1
    %16 = vsyncpa %s15, 0
    loop: start=0, step=1, limit=6
    $region2: #{tpu_custom_call.1} parent=1 // loop_pre_header
      _
    $region3: #{tpu_custom_call.1} parent=1 // loop_header
      %s18 = sphi 0, %s22
      %p19 = scmp.ge.s32.totalorder %s18, 6
      %s28 = sphi 0, %s30
      %s31 = sphi 0, %s28
      %s32 = sphi 0, %s31
      %s48 = sphi 0, %s32
      %s54 = sphi 0, %s56
      %s57 = sphi 0, %s54
      %s58 = sphi 0, %s57
      %s74 = sphi 0, %s58
      %s78 = sphi 0, %s78
      %s80 = sphi 0, %s78
      %s81 = sphi 0, %s80
      %s95 = sphi 0, %s81
      %s101 = sphi 0, %s103
      %s104 = sphi 0, %s101
      %s105 = sphi 0, %s104
      %s121 = sphi 0, %s105
    $region4: #{tpu_custom_call.1} parent=1 // loop_header_branch
      %21 = sbr.rel (%p19) target = $region8
    $region5: #{tpu_custom_call.1} parent=1 // loop_body
      %s23 = ssub.s32 %s18, 1
      %s24 = ssub.s32 %s18, 2
      %s25 = sadd.s32 %s18, 1
      %s26 = ssub.s32 %s18, %s25
      %p27 = scmp.eq.s32.totalorder %s26, 0
      %s29 = sadd.s32 %s28, 1
      %s30 = scalar_select %p27, %s28, %s29
      %p33 = pneg %p27
      %p34 = scmp.eq.s32.totalorder %s18, 3
      %p35 = por %p33, %p34
      %p36 = scmp.ne.s32.totalorder %s28, %s31
      %p37 = scmp.eq.s32.totalorder %s18, 0
      %p38 = por %p36, %p37
      %p39 = scmp.ne.s32.totalorder %s28, %s31
      %p40 = scmp.eq.s32.totalorder %s23, 3
      %p41 = por %p39, %p40
      %p42 = scmp.ne.s32.totalorder %s31, %s32
      %p43 = scmp.eq.s32.totalorder %s23, 0
      %p44 = por %p42, %p43
      %p45 = scmp.ne.s32.totalorder %s31, %s32
      %p46 = scmp.eq.s32.totalorder %s24, 3
      %p47 = por %p45, %p46
      %p49 = scmp.ne.s32.totalorder %s32, %s48
      %p50 = scmp.eq.s32.totalorder %s24, 0
      %p51 = por %p49, %p50
      %s52 = ssub.s32 %s18, %s25
      %p53 = scmp.eq.s32.totalorder %s52, 0
      %s55 = sadd.s32 %s54, 1
      %s56 = scalar_select %p53, %s54, %s55
      %p59 = pneg %p53
      %p60 = scmp.eq.s32.totalorder %s18, 3
      %p61 = por %p59, %p60
      %p62 = scmp.ne.s32.totalorder %s54, %s57
      %p63 = scmp.eq.s32.totalorder %s18, 0
      %p64 = por %p62, %p63
      %p65 = scmp.ne.s32.totalorder %s54, %s57
      %p66 = scmp.eq.s32.totalorder %s23, 3
      %p67 = por %p65, %p66
      %p68 = scmp.ne.s32.totalorder %s57, %s58
      %p69 = scmp.eq.s32.totalorder %s23, 0
      %p70 = por %p68, %p69
      %p71 = scmp.ne.s32.totalorder %s57, %s58
      %p72 = scmp.eq.s32.totalorder %s24, 3
      %p73 = por %p71, %p72
      %p75 = scmp.ne.s32.totalorder %s58, %s74
      %p76 = scmp.eq.s32.totalorder %s24, 0
      %p77 = por %p75, %p76
      %s79 = sadd.s32 %s78, 1
      %p82 = scmp.eq.s32.totalorder %s18, 3
      %p83 = scmp.ne.s32.totalorder %s78, %s80
      %p84 = scmp.eq.s32.totalorder %s18, 0
      %p85 = por %p83, %p84
      %p86 = scmp.ne.s32.totalorder %s78, %s80
      %p87 = scmp.eq.s32.totalorder %s23, 3
      %p88 = por %p86, %p87
      %p89 = scmp.ne.s32.totalorder %s80, %s81
      %p90 = scmp.eq.s32.totalorder %s23, 0
      %p91 = por %p89, %p90
      %p92 = scmp.ne.s32.totalorder %s80, %s81
      %p93 = scmp.eq.s32.totalorder %s24, 3
      %p94 = por %p92, %p93
      %p96 = scmp.ne.s32.totalorder %s81, %s95
      %p97 = scmp.eq.s32.totalorder %s24, 0
      %p98 = por %p96, %p97
      %s99 = ssub.s32 %s18, %s25
      %p100 = scmp.eq.s32.totalorder %s99, 0
      %s102 = sadd.s32 %s101, 1
      %s103 = scalar_select %p100, %s101, %s102
      %p106 = pneg %p100
      %p107 = scmp.eq.s32.totalorder %s18, 3
      %p108 = por %p106, %p107
      %p109 = scmp.ne.s32.totalorder %s101, %s104
      %p110 = scmp.eq.s32.totalorder %s18, 0
      %p111 = por %p109, %p110
      %p112 = scmp.ne.s32.totalorder %s101, %s104
      %p113 = scmp.eq.s32.totalorder %s23, 3
      %p114 = por %p112, %p113
      %p115 = scmp.ne.s32.totalorder %s104, %s105
      %p116 = scmp.eq.s32.totalorder %s23, 0
      %p117 = por %p115, %p116
      %p118 = scmp.ne.s32.totalorder %s104, %s105
      %p119 = scmp.eq.s32.totalorder %s24, 3
      %p120 = por %p118, %p119
      %p122 = scmp.ne.s32.totalorder %s105, %s121
      %p123 = scmp.eq.s32.totalorder %s24, 0
      %p124 = por %p122, %p123
      %p125 = scmp.le.s32.totalorder 1, %s18
      %p126 = scmp.lt.s32.totalorder %s18, 5
      %p127 = pnand %p125, %p126
      %p128 = pneg %p127
      // Predicated region
      $region9: #{tpu_custom_call.1} parent=5 // pred_check
        _
      $region10: #{tpu_custom_call.1} parent=5 // pred_check_branch
        %130 = sbr.rel (%p127) target = $region12
      $region11: #{tpu_custom_call.1} parent=5 // pred_region
        %s131 = ssub.s32 %s18, 1
        // Predicated region
        $region13: #{tpu_custom_call.1} parent=11 // pred_check
          %p132 = pneg %p91
        $region14: #{tpu_custom_call.1} parent=11 // pred_check_branch
          %134 = sbr.rel (%p132) target = $region16
        $region15: #{tpu_custom_call.1} parent=11 // pred_region
          _
        $region16: #{tpu_custom_call.1} parent=11 // pred_fallthru
          _
      $region12: #{tpu_custom_call.1} parent=5 // pred_fallthru
        _
      %p135 = scmp.lt.s32.totalorder %s18, 4
      // Predicated region
      $region17: #{tpu_custom_call.1} parent=5 // pred_check
        %p136 = pneg %p135
      $region18: #{tpu_custom_call.1} parent=5 // pred_check_branch
        %138 = sbr.rel (%p136) target = $region20
      $region19: #{tpu_custom_call.1} parent=5 // pred_region
        // Predicated region
        $region21: #{tpu_custom_call.1} parent=19 // pred_check
          %p139 = pneg %p38
        $region22: #{tpu_custom_call.1} parent=19 // pred_check_branch
          %141 = sbr.rel (%p139) target = $region24
        $region23: #{tpu_custom_call.1} parent=19 // pred_region
          %s142 = sand.u32 %s28, 1
          %s143 = scalar_lea.sflag [#allocation3], %s142
          %s144 = sand.u32 %s28, 1
          %s145 = smul.addr %s144, 8
          %s146 = scalar_lea.vmem [#allocation2], %s145
          %148 = vsyncadd %s143, 0
          %s149 = smul.addr %s18, 8
          %s150 = scalar_lea.hbm %s0, %s149
          %s152 = sshll.u32 %s150, 4
          %s153 = int_to_ptr.hbm [resolvable:$true] %s152
          %s154 = sshll.u32 %s146, 4
          %s155 = int_to_ptr.vmem [resolvable:$true] %s154
          %157 = dma.hbm_to_vmem [thread:$0]  %s153, 128, %s155, %s143
        $region24: #{tpu_custom_call.1} parent=19 // pred_fallthru
          _
        // Predicated region
        $region25: #{tpu_custom_call.1} parent=19 // pred_check
          %p158 = pneg %p64
        $region26: #{tpu_custom_call.1} parent=19 // pred_check_branch
          %160 = sbr.rel (%p158) target = $region28
        $region27: #{tpu_custom_call.1} parent=19 // pred_region
          %s161 = sand.u32 %s54, 1
          %s162 = scalar_lea.sflag [#allocation6], %s161
          %s163 = sand.u32 %s54, 1
          %s164 = smul.addr %s163, 8
          %s165 = scalar_lea.vmem [#allocation5], %s164
          %167 = vsyncadd %s162, 0
          %s168 = smul.addr %s18, 8
          %s169 = scalar_lea.hbm %s1, %s168
          %s171 = sshll.u32 %s169, 4
          %s172 = int_to_ptr.hbm [resolvable:$true] %s171
          %s173 = sshll.u32 %s165, 4
          %s174 = int_to_ptr.vmem [resolvable:$true] %s173
          %176 = dma.hbm_to_vmem [thread:$0]  %s172, 128, %s174, %s162
        $region28: #{tpu_custom_call.1} parent=19 // pred_fallthru
          _
      $region20: #{tpu_custom_call.1} parent=5 // pred_fallthru
        _
      %p177 = scmp.le.s32.totalorder 1, %s18
      %p178 = scmp.lt.s32.totalorder %s18, 5
      %p179 = pnand %p177, %p178
      %p180 = pneg %p179
      // Predicated region
      $region29: #{tpu_custom_call.1} parent=5 // pred_check
        _
      $region30: #{tpu_custom_call.1} parent=5 // pred_check_branch
        %182 = sbr.rel (%p179) target = $region32
      $region31: #{tpu_custom_call.1} parent=5 // pred_region
        %s183 = ssub.s32 %s18, 1
        %s184 = sand.u32 %s31, 1
        %s185 = scalar_lea.sflag [#allocation3], %s184
        %s186 = sand.u32 %s31, 1
        %s187 = smul.addr %s186, 8
        %s188 = scalar_lea.vmem [#allocation2], %s187
        // Predicated region
        $region33: #{tpu_custom_call.1} parent=31 // pred_check
          %p189 = pneg %p44
        $region34: #{tpu_custom_call.1} parent=31 // pred_check_branch
          %191 = sbr.rel (%p189) target = $region36
        $region35: #{tpu_custom_call.1} parent=31 // pred_region
          %193 = dma.done %s185, 128
        $region36: #{tpu_custom_call.1} parent=31 // pred_fallthru
          _
        %s194 = sand.u32 %s57, 1
        %s195 = scalar_lea.sflag [#allocation6], %s194
        %s196 = sand.u32 %s57, 1
        %s197 = smul.addr %s196, 8
        %s198 = scalar_lea.vmem [#allocation5], %s197
        // Predicated region
        $region37: #{tpu_custom_call.1} parent=31 // pred_check
          %p199 = pneg %p70
        $region38: #{tpu_custom_call.1} parent=31 // pred_check_branch
          %201 = sbr.rel (%p199) target = $region40
        $region39: #{tpu_custom_call.1} parent=31 // pred_region
          %203 = dma.done %s195, 128
        $region40: #{tpu_custom_call.1} parent=31 // pred_fallthru
          _
        %s204 = sand.u32 %s31, 1
        %s205 = scalar_lea.sflag [#allocation3], %s204
        %s206 = sand.u32 %s31, 1
        %s207 = smul.addr %s206, 8
        %s208 = scalar_lea.vmem [#allocation2], %s207
        %p209 = pneg %p44
        %p210 = pneg %p41
        %s211 = sand.u32 %s57, 1
        %s212 = scalar_lea.sflag [#allocation6], %s211
        %s213 = sand.u32 %s57, 1
        %s214 = smul.addr %s213, 8
        %s215 = scalar_lea.vmem [#allocation5], %s214
        %p216 = pneg %p70
        %p217 = pneg %p67
        %p218 = pneg %p91
        %p219 = pneg %p88
        %p220 = pneg %p117
        %p221 = pneg %p114
        %s222 = sand.u32 %s104, 1
        %s223 = scalar_lea.sflag [#allocation4], %s222
        %s224 = sand.u32 %s104, 1
        %s225 = scalar_lea.vmem [#allocation7], %s224
        %v226 = vld [vmem:[%s188] sm:$0xff]
        %v227 = vmul.f32 %v226, 0.25
        %v228 = vld [vmem:[%s198] sm:$0xff]
        %v229 = vmul.f32 %v228, 0.25
        %v230 = vld [vmem:[%s2] sm:$0x1]
        %231 = vmax.xlane.f32.xlu0 %v229
        %v232 = vpop.xlane.xlu0 %231
        %v233 = vsub.f32 %v229, %v232
        %v235 = vperm.slane %v230, 0
        %v237 = vadd.f32 %v233, %v235
        %v238 = vmul.f32 %v237, 1.442695
        %v239 = vpow.pop %v238
        %240 = vadd.xlane.f32.xlu0 %v239
        %v241 = vpop.xlane.xlu0 %240
        %v242 = vrcp.pop %v241
        %v243 = vmul.f32 %v241, %v242
        %v244 = vsub.f32 1.0, %v243
        %v245 = vmul.f32 %v242, %v244
        %v246 = vadd.f32 %v242, %v245
        %vm247 = vweird.f32 %v241
        %vm248 = vweird.f32 %v242
        %vm249 = vmor %vm247, %vm248
        %v250 = vsel %vm249, %v242, %v246
        %v251 = vand.u32 2147483647, %v241
        %vm252 = vcmp.eq.f32.partialorder %v251, 8.507059e+37
        %v253 = vand.u32 %v241, 2147483648
        %v254 = vor.u32 1.1754944e-38, %v253
        %v255 = vsel %vm252, %v254, %v250
        %v256 = vmul.f32 %v239, %v255
        %257 = vmax.xlane.f32.xlu0 %v227
        %v258 = vpop.xlane.xlu0 %257
        %v259 = vsub.f32 %v227, %v258
        %v260 = vmul.f32 %v259, 1.442695
        %v261 = vpow.pop %v260
        %262 = vadd.xlane.f32.xlu0 %v261
        %v263 = vpop.xlane.xlu0 %262
        %v264 = vlog2.pop %v263
        %v265 = vmul.f32 %v264, 0.6931472
        %v266 = vlog2.pop %v241
        %v267 = vmul.f32 %v266, 0.6931472
        %v268 = vsub.f32 %v265, %v267
        %v269 = vsub.f32 %v237, %v259
        %v270 = vadd.f32 %v269, %v268
        %v271 = vmul.f32 %v256, %v270
        %p272 = scmp.ne.s32.totalorder %s23, 3
        // Predicated region
        $region41: #{tpu_custom_call.1} parent=31 // pred_check
          %p273 = pneg %p272
        $region42: #{tpu_custom_call.1} parent=31 // pred_check_branch
          %275 = sbr.rel (%p273) target = $region44
        $region43: #{tpu_custom_call.1} parent=31 // pred_region
          %v276 = vrot.slane %v271, 4
          %v277 = vadd.f32 %v271, %v276
          %v278 = vrot.slane %v277, 2
          %v279 = vadd.f32 %v277, %v278
          %v280 = vrot.slane %v279, 1
          %v281 = vadd.f32 %v279, %v280
          %282 = vst [vmem:[%s225] sm:$0x1] %v281
        $region44: #{tpu_custom_call.1} parent=31 // pred_fallthru
          _
        %p283 = scmp.eq.s32.totalorder %s23, 3
        // Predicated region
        $region45: #{tpu_custom_call.1} parent=31 // pred_check
          %p284 = pneg %p283
        $region46: #{tpu_custom_call.1} parent=31 // pred_check_branch
          %286 = sbr.rel (%p284) target = $region48
        $region47: #{tpu_custom_call.1} parent=31 // pred_region
          %v287 = vlaneseq
          %v288 = vshrl.u32 %v287, 7
          %vm289 = vcmp.lt.s32.totalorder %v288, 6
          %v290 = vsel %vm289, 1, 0
          %vm291 = vcmp.eq.s32.totalorder %v290, 1
          %v292 = vsel %vm291, %v271, 0.0
          %v293 = vrot.slane %v292, 4
          %v294 = vadd.f32 %v292, %v293
          %v295 = vrot.slane %v294, 2
          %v296 = vadd.f32 %v294, %v295
          %v297 = vrot.slane %v296, 1
          %v298 = vadd.f32 %v296, %v297
          %299 = vst [vmem:[%s225] sm:$0x1] %v298
        $region48: #{tpu_custom_call.1} parent=31 // pred_fallthru
          _
        %s300 = sand.u32 %s104, 1
        %s301 = scalar_lea.sflag [#allocation4], %s300
        %s302 = sand.u32 %s104, 1
        %s303 = scalar_lea.vmem [#allocation7], %s302
        // Predicated region
        $region49: #{tpu_custom_call.1} parent=31 // pred_check
          %p304 = pneg %p114
        $region50: #{tpu_custom_call.1} parent=31 // pred_check_branch
          %306 = sbr.rel (%p304) target = $region52
        $region51: #{tpu_custom_call.1} parent=31 // pred_region
          %308 = vsyncadd %s301, 0
          %s309 = scalar_lea.hbm %s3, %s23
          %s311 = sshll.u32 %s303, 4
          %s312 = int_to_ptr.vmem [resolvable:$true] %s311
          %s313 = sshll.u32 %s309, 4
          %s314 = int_to_ptr.hbm [resolvable:$true] %s313
          %316 = dma.vmem_to_hbm [thread:$0]  %s312, 16, %s314, %s301
        $region52: #{tpu_custom_call.1} parent=31 // pred_fallthru
          _
      $region32: #{tpu_custom_call.1} parent=5 // pred_fallthru
        _
      %p317 = scmp.le.s32.totalorder 2, %s18
      // Predicated region
      $region53: #{tpu_custom_call.1} parent=5 // pred_check
        %p318 = pneg %p317
      $region54: #{tpu_custom_call.1} parent=5 // pred_check_branch
        %320 = sbr.rel (%p318) target = $region56
      $region55: #{tpu_custom_call.1} parent=5 // pred_region
        %s321 = ssub.s32 %s18, 2
        // Predicated region
        $region57: #{tpu_custom_call.1} parent=55 // pred_check
          %p322 = pneg %p120
        $region58: #{tpu_custom_call.1} parent=55 // pred_check_branch
          %324 = sbr.rel (%p322) target = $region60
        $region59: #{tpu_custom_call.1} parent=55 // pred_region
          %s325 = sand.u32 %s105, 1
          %s326 = scalar_lea.sflag [#allocation4], %s325
          %s327 = sand.u32 %s105, 1
          %s328 = scalar_lea.vmem [#allocation7], %s327
          %330 = dma.done %s326, 16
        $region60: #{tpu_custom_call.1} parent=55 // pred_fallthru
          _
      $region56: #{tpu_custom_call.1} parent=5 // pred_fallthru
        _
    $region6: #{tpu_custom_call.1} parent=1 // loop_footer
      %s22 = sadd.s32 1, %s18
    $region7: #{tpu_custom_call.1} parent=1 // loop_footer_branch
      %17 = sbr.rel target = $region3
    $region8: #{tpu_custom_call.1} parent=1 // loop_exit
      _
    %331 = vsyncpa [#allocation3], 1
    %s332 = scalar_lea.sflag [#allocation3], 1
    %333 = vsyncpa %s332, 1
    %334 = vsyncpa [#allocation6], 1
    %s335 = scalar_lea.sflag [#allocation6], 1
    %336 = vsyncpa %s335, 1
    %337 = vsyncpa [#allocation4], 1
    %s338 = scalar_lea.sflag [#allocation4], 1
    %339 = vsyncpa %s338, 1

</llo_original>
